<compile_context>
chip_gen: v5e
topology: v5e:2x2
jax: 0.10.0
libtpu: 0.0.40
codegen_flags: <defaults>
</compile_context>

<pallas_src>
import jax
import jax.numpy as jnp
from jax.experimental import pallas as pl
from jax.experimental.pallas import tpu as pltpu


def _linear_sigmoid_kernel(x_ref, w_ref, b_ref, o_ref):
    # x_ref: (B, K) bf16   w_ref: (K, TN) bf16   b_ref: (1, TN) f32   o_ref: (B, TN) f32
    y = jnp.dot(x_ref[...], w_ref[...], preferred_element_type=jnp.float32)
    y = y + b_ref[...]                                   # broadcast bias over batch (f32)
    # sigmoid(y) = 1 / (1 + exp(-y)); exp and approx-reciprocal both go to the EUP slot.
    o_ref[...] = pl.reciprocal(1.0 + jnp.exp(-y), approx=True).astype(o_ref.dtype)


def prepare_params(weight, bias, *, n_blocks=1):
    """One-time param prep: transpose, cast weight to bf16, zero-pad N to a
    lane-dense multiple of 128 * n_blocks. weight: (836, 384), bias: (836,)."""
    out_f, in_f = weight.shape
    pad_unit = 128 * n_blocks
    n_padded = ((out_f + pad_unit - 1) // pad_unit) * pad_unit
    w_t = jnp.zeros((in_f, n_padded), jnp.bfloat16)
    w_t = w_t.at[:, :out_f].set(weight.T.astype(jnp.bfloat16))
    b_p = jnp.zeros((1, n_padded), jnp.float32)
    b_p = b_p.at[:, :out_f].set(bias.astype(jnp.float32))
    return w_t, b_p


def imageclassify_forward(x, w_t_padded, b_padded, out_features, *, n_blocks=1):
    """F.sigmoid(x @ W^T + b).

    x: (B, 384) f32/bf16, w_t_padded: (384, Np) bf16, b_padded: (1, Np) f32.
    Returns (B, out_features) f32. Set n_blocks=2 on v7x to use both TensorCores.
    """
    B, K = x.shape
    Np = w_t_padded.shape[1]
    assert Np % n_blocks == 0
    TN = Np // n_blocks
    assert TN % 128 == 0, "per-block output width must stay lane-dense"

    x_bf16 = x.astype(jnp.bfloat16)

    bytes_accessed = (
        x_bf16.size * 2            # x (bf16)
        + w_t_padded.size * 2      # weight (bf16) — dominant term
        + b_padded.size * 4        # bias (f32)
        + B * Np * 4               # output (f32)
    )
    cost = pl.CostEstimate(
        flops=2 * B * K * out_features,
        transcendentals=B * out_features,
        bytes_accessed=bytes_accessed,
    )

    out_padded = pl.pallas_call(
        _linear_sigmoid_kernel,
        out_shape=jax.ShapeDtypeStruct((B, Np), jnp.float32),
        grid=(n_blocks,),
        in_specs=[
            pl.BlockSpec((B, K), lambda j: (0, 0)),    # x replicated per N-block
            pl.BlockSpec((K, TN), lambda j: (0, j)),   # weight column slab
            pl.BlockSpec((1, TN), lambda j: (0, j)),   # bias column slab
        ],
        out_specs=pl.BlockSpec((B, TN), lambda j: (0, j)),
        compiler_params=pltpu.CompilerParams(
            dimension_semantics=("parallel",),
        ),
        cost_estimate=cost,
    )(x_bf16, w_t_padded, b_padded)

    return out_padded[:, :out_features]


if __name__ == "__main__":
    key = jax.random.PRNGKey(0)
    k_x, k_w, k_b = jax.random.split(key, 3)

    IN_F, OUT_F, BATCH = 384, 836, 8

    # Deterministic synthetic parameters (PyTorch layout: weight (836, 384), bias (836,))
    bound = 1.0 / (IN_F ** 0.5)
    weight = jax.random.uniform(k_w, (OUT_F, IN_F), jnp.float32, -bound, bound)
    bias = jax.random.uniform(k_b, (OUT_F,), jnp.float32, -bound, bound)
    x = jax.random.normal(k_x, (BATCH, IN_F), jnp.float32)

    # One-time param prep (bf16 weight, lane-padded N), then the fused kernel call.
    w_t_p, b_p = prepare_params(weight, bias, n_blocks=1)
    out = imageclassify_forward(x, w_t_p, b_p, OUT_F, n_blocks=1)
    out = jax.block_until_ready(out)

    # Reference check in plain JAX (tolerance loosened for bf16 weights + approx reciprocal).
    ref = jax.nn.sigmoid(x @ weight.T + bias)
    assert out.shape == (BATCH, OUT_F)
    max_err = float(jnp.max(jnp.abs(out - ref)))
    assert jnp.allclose(out, ref, atol=2e-2, rtol=2e-2), max_err

    print("KERNEL_OK")
</pallas_src>

<mosaic_0001>
module attributes {stable_mosaic.version = 11 : i64} {
  func.func @_linear_sigmoid_kernel(%arg0: i32, %arg1: memref<8x384xbf16, #tpu.memory_space<vmem>>, %arg2: memref<384x896xbf16, #tpu.memory_space<vmem>>, %arg3: memref<1x896xf32, #tpu.memory_space<vmem>>, %arg4: memref<8x896xf32, #tpu.memory_space<vmem>>) attributes {dimension_semantics = [#tpu.dimension_semantics<parallel>], iteration_bounds = array<i64: 1>, scalar_prefetch = 0 : i64, scratch_operands = 0 : i64, tpu.core_type = #tpu.core_type<tc>, window_params = [{pipeline_mode = #tpu.pipeline_mode<synchronous>, transform_indices = @transform_0, window_bounds = array<i64: 8, 384>}, {transform_indices = @transform_1, window_bounds = array<i64: 384, 896>}, {transform_indices = @transform_2, window_bounds = array<i64: 1, 896>}, {transform_indices = @transform_3, window_bounds = array<i64: 8, 896>}]} {
    %c0 = arith.constant 0 : index
    %c0_0 = arith.constant 0 : index
    %0 = vector.load %arg1[%c0, %c0_0] : memref<8x384xbf16, #tpu.memory_space<vmem>>, vector<8x384xbf16>
    %c0_1 = arith.constant 0 : index
    %c0_2 = arith.constant 0 : index
    %1 = vector.load %arg2[%c0_1, %c0_2] : memref<384x896xbf16, #tpu.memory_space<vmem>>, vector<384x896xbf16>
    %cst = arith.constant dense<0.000000e+00> : vector<8x896xf32>
    %2 = tpu.matmul %0, %1, %cst {dimension_numbers = #tpu.dot_dimension_numbers<[1], [0], [0], [1], [0, 0, 1, 1], [], []>} : vector<8x384xbf16>, vector<384x896xbf16>, vector<8x896xf32> -> vector<8x896xf32>
    %c0_3 = arith.constant 0 : index
    %c0_4 = arith.constant 0 : index
    %3 = vector.load %arg3[%c0_3, %c0_4] : memref<1x896xf32, #tpu.memory_space<vmem>>, vector<1x896xf32>
    %4 = vector.broadcast %3 : vector<1x896xf32> to vector<8x896xf32>
    %5 = arith.addf %2, %4 : vector<8x896xf32>
    %cst_5 = arith.constant 0.000000e+00 : f32
    %6 = vector.broadcast %cst_5 : f32 to vector<8x896xf32>
    %7 = arith.subf %6, %5 : vector<8x896xf32>
    %8 = math.exp %7 : vector<8x896xf32>
    %cst_6 = arith.constant 1.000000e+00 : f32
    %9 = vector.broadcast %cst_6 : f32 to vector<8x896xf32>
    %10 = arith.addf %9, %8 : vector<8x896xf32>
    %11 = tpu.reciprocal %10 {approx = true} : vector<8x896xf32> -> vector<8x896xf32>
    %c0_7 = arith.constant 0 : index
    %c0_8 = arith.constant 0 : index
    %12 = vector.load %arg4[%c0_7, %c0_8] : memref<8x896xf32, #tpu.memory_space<vmem>>, vector<8x896xf32>
    tpu.vector_store %arg4[%c0_7, %c0_8], %11 {strides = array<i32>} : memref<8x896xf32, #tpu.memory_space<vmem>>, vector<8x896xf32>,
    return
  }
  func.func @transform_0(%arg0: i32) -> (i32, i32) {
    %c0_i32 = arith.constant 0 : i32
    %c0_i32_0 = arith.constant 0 : i32
    %c0_i32_1 = arith.constant 0 : i32
    return %c0_i32, %c0_i32_0 : i32, i32
  }
  func.func @transform_1(%arg0: i32) -> (i32, i32) {
    %c0_i32 = arith.constant 0 : i32
    %c0_i32_0 = arith.constant 0 : i32
    return %c0_i32, %arg0 : i32, i32
  }
  func.func @transform_2(%arg0: i32) -> (i32, i32) {
    %c0_i32 = arith.constant 0 : i32
    %c0_i32_0 = arith.constant 0 : i32
    return %c0_i32, %arg0 : i32, i32
  }
  func.func @transform_3(%arg0: i32) -> (i32, i32) {
    %c0_i32 = arith.constant 0 : i32
    %c0_i32_0 = arith.constant 0 : i32
    return %c0_i32, %arg0 : i32, i32
  }
}

</mosaic_0001>

<llo_original>
// kernel: tpu_custom_call.1
$region0: #{tpu_custom_call.1}
  #allocation0 [shape = 'u32[]', space=smem, size = 0x4, offset = 0x4, fixed_abs, tag = 'smem constant byte address 0x4 - core index']
  #allocation1 [shape = 'u32[72,128]{1,0:T(1,128)}', space=vmem, size = 0x9000, scoped, tag = 'internal scratch']
  %s0 = inlined_call_operand.hbm [shape: bf16[8,384], index: 0, kind: input, shape index: {}]
  %s1 = inlined_call_operand.hbm [shape: bf16[384,896], index: 1, kind: input, shape index: {}]
  %s2 = inlined_call_operand.hbm [shape: f32[1,896], index: 2, kind: input, shape index: {}]
  %s3 = inlined_call_operand.hbm [shape: f32[8,896], index: 3, kind: output, shape index: {}]
  %s4 = sld [smem:[#allocation0]]
  $region34: #{tpu_custom_call.1} parent=0
    _
  %s6 = ssub.s32 1, %s4
  %s7 = scalar_select 0, %s6, %s4
  $region1: #{tpu_custom_call.1} parent=0
    #allocation2 [shape = 'u8[6144]{0}', space=vmem, size = 0x1800, scoped, tag = 'input window, operand 0, single buffered']
    #allocation3 [shape = 's32[1]{0}', space=sflag, size = 0x4, scoped, tag = 'scoped memory for tpu_custom_call.1']
    #allocation4 [shape = 's32[1]{0}', space=sflag, size = 0x4, scoped, tag = 'scoped memory for tpu_custom_call.1']
    #allocation5 [shape = 'u8[688128]{0}', space=vmem, size = 0xa8000, scoped, tag = 'input window, operand 1, single buffered']
    #allocation6 [shape = 's32[1]{0}', space=sflag, size = 0x4, scoped, tag = 'scoped memory for tpu_custom_call.1']
    #allocation7 [shape = 'u8[3584]{0}', space=vmem, size = 0x1000, scoped, tag = 'input window, operand 2, single buffered']
    #allocation8 [shape = 'u8[28672]{0}', space=vmem, size = 0x7000, scoped, tag = 'output window, operand 0, single buffered']
    %8 = vsyncpa [#allocation3], 0
    %9 = vsyncpa [#allocation6], 0
    %10 = vsyncpa [#allocation4], 0
    // Predicated region
    $region2: #{tpu_custom_call.1} parent=1 // pred_check
      _
    $region3: #{tpu_custom_call.1} parent=1 // pred_check_branch
      %12 = sbr.rel (0) target = $region5
    $region4: #{tpu_custom_call.1} parent=1 // pred_region
      %14 = vsyncadd [#allocation3], 0
      %s16 = sshll.u32 %s0, 4
      %s17 = int_to_ptr.hbm [resolvable:$true] %s16
      %s18 = sshll.u32 [#allocation2], 4
      %s19 = int_to_ptr.vmem [resolvable:$true] %s18
      %21 = dma.hbm_to_vmem [thread:$0]  %s17, 192, %s19, [#allocation3]
    $region5: #{tpu_custom_call.1} parent=1 // pred_fallthru
      _
    // Predicated region
    $region6: #{tpu_custom_call.1} parent=1 // pred_check
      _
    $region7: #{tpu_custom_call.1} parent=1 // pred_check_branch
      %23 = sbr.rel (0) target = $region9
    $region8: #{tpu_custom_call.1} parent=1 // pred_region
      %25 = vsyncadd [#allocation6], 0
      %s26 = sshll.u32 %s1, 4
      %s27 = int_to_ptr.hbm [resolvable:$true] %s26
      %s28 = sshll.u32 [#allocation5], 4
      %s29 = int_to_ptr.vmem [resolvable:$true] %s28
      %34 = dma.hbm_to_vmem [thread:$0]  %s27, 21504, %s29, [#allocation6], 448, 448, 28
    $region9: #{tpu_custom_call.1} parent=1 // pred_fallthru
      _
    // Predicated region
    $region10: #{tpu_custom_call.1} parent=1 // pred_check
      _
    $region11: #{tpu_custom_call.1} parent=1 // pred_check_branch
      %36 = sbr.rel (0) target = $region13
    $region12: #{tpu_custom_call.1} parent=1 // pred_region
      %38 = vsyncadd [#allocation6], 0
      %s40 = sshll.u32 %s2, 4
      %s41 = int_to_ptr.hbm [resolvable:$true] %s40
      %s42 = sshll.u32 [#allocation7], 4
      %s43 = int_to_ptr.vmem [resolvable:$true] %s42
      %45 = dma.hbm_to_vmem [thread:$0]  %s41, 112, %s43, [#allocation6]
    $region13: #{tpu_custom_call.1} parent=1 // pred_fallthru
      _
    // Predicated region
    $region14: #{tpu_custom_call.1} parent=1 // pred_check
      _
    $region15: #{tpu_custom_call.1} parent=1 // pred_check_branch
      %47 = sbr.rel (0) target = $region17
    $region16: #{tpu_custom_call.1} parent=1 // pred_region
      %49 = dma.done [#allocation3], 192
    $region17: #{tpu_custom_call.1} parent=1 // pred_fallthru
      _
    // Predicated region
    $region18: #{tpu_custom_call.1} parent=1 // pred_check
      _
    $region19: #{tpu_custom_call.1} parent=1 // pred_check_branch
      %51 = sbr.rel (0) target = $region21
    $region20: #{tpu_custom_call.1} parent=1 // pred_region
      %53 = dma.done [#allocation6], 21504
    $region21: #{tpu_custom_call.1} parent=1 // pred_fallthru
      _
    // Predicated region
    $region22: #{tpu_custom_call.1} parent=1 // pred_check
      _
    $region23: #{tpu_custom_call.1} parent=1 // pred_check_branch
      %55 = sbr.rel (0) target = $region25
    $region24: #{tpu_custom_call.1} parent=1 // pred_region
      %57 = dma.done [#allocation6], 112
    $region25: #{tpu_custom_call.1} parent=1 // pred_fallthru
      _
    %v58 = vld [vmem:[#allocation2] sm:$0xff]
    %v59 = vld [vmem:[#allocation2 + $0x8] sm:$0xf]
    %v60 = vld [vmem:[#allocation5] sm:$0xff]
    %v61 = vld [vmem:[#allocation5 + $0x8] sm:$0xff]
    %v62 = vld [vmem:[#allocation5 + $0x10] sm:$0xff]
    %v63 = vld [vmem:[#allocation5 + $0x18] sm:$0xf]
    %v64 = vld [vmem:[#allocation5 + $0x1c] sm:$0xff]
    %v65 = vld [vmem:[#allocation5 + $0x24] sm:$0xff]
    %v66 = vld [vmem:[#allocation5 + $0x2c] sm:$0xff]
    %v67 = vld [vmem:[#allocation5 + $0x34] sm:$0xf]
    %v68 = vld [vmem:[#allocation5 + $0x38] sm:$0xff]
    %v69 = vld [vmem:[#allocation5 + $0x40] sm:$0xff]
    %v70 = vld [vmem:[#allocation5 + $0x48] sm:$0xff]
    %v71 = vld [vmem:[#allocation5 + $0x50] sm:$0xf]
    %v72 = vld [vmem:[#allocation5 + $0x54] sm:$0xff]
    %v73 = vld [vmem:[#allocation5 + $0x5c] sm:$0xff]
    %v74 = vld [vmem:[#allocation5 + $0x64] sm:$0xff]
    %v75 = vld [vmem:[#allocation5 + $0x6c] sm:$0xf]
    %v76 = vld [vmem:[#allocation5 + $0x70] sm:$0xff]
    %v77 = vld [vmem:[#allocation5 + $0x78] sm:$0xff]
    %v78 = vld [vmem:[#allocation5 + $0x80] sm:$0xff]
    %v79 = vld [vmem:[#allocation5 + $0x88] sm:$0xf]
    %v80 = vld [vmem:[#allocation5 + $0x8c] sm:$0xff]
    %v81 = vld [vmem:[#allocation5 + $0x94] sm:$0xff]
    %v82 = vld [vmem:[#allocation5 + $0x9c] sm:$0xff]
    %v83 = vld [vmem:[#allocation5 + $0xa4] sm:$0xf]
    %v84 = vld [vmem:[#allocation5 + $0xa8] sm:$0xff]
    %v85 = vld [vmem:[#allocation5 + $0xb0] sm:$0xff]
    %v86 = vld [vmem:[#allocation5 + $0xb8] sm:$0xff]
    %v87 = vld [vmem:[#allocation5 + $0xc0] sm:$0xf]
    %v88 = vld [vmem:[#allocation5 + $0xc4] sm:$0xff]
    %v89 = vld [vmem:[#allocation5 + $0xcc] sm:$0xff]
    %v90 = vld [vmem:[#allocation5 + $0xd4] sm:$0xff]
    %v91 = vld [vmem:[#allocation5 + $0xdc] sm:$0xf]
    %v92 = vld [vmem:[#allocation5 + $0xe0] sm:$0xff]
    %v93 = vld [vmem:[#allocation5 + $0xe8] sm:$0xff]
    %v94 = vld [vmem:[#allocation5 + $0xf0] sm:$0xff]
    %v95 = vld [vmem:[#allocation5 + $0xf8] sm:$0xf]
    %v96 = vld [vmem:[#allocation5 + $0xfc] sm:$0xff]
    %v97 = vld [vmem:[#allocation5 + $0x104] sm:$0xff]
    %v98 = vld [vmem:[#allocation5 + $0x10c] sm:$0xff]
    %v99 = vld [vmem:[#allocation5 + $0x114] sm:$0xf]
    %v100 = vld [vmem:[#allocation5 + $0x118] sm:$0xff]
    %v101 = vld [vmem:[#allocation5 + $0x120] sm:$0xff]
    %v102 = vld [vmem:[#allocation5 + $0x128] sm:$0xff]
    %v103 = vld [vmem:[#allocation5 + $0x130] sm:$0xf]
    %v104 = vld [vmem:[#allocation5 + $0x134] sm:$0xff]
    %v105 = vld [vmem:[#allocation5 + $0x13c] sm:$0xff]
    %v106 = vld [vmem:[#allocation5 + $0x144] sm:$0xff]
    %v107 = vld [vmem:[#allocation5 + $0x14c] sm:$0xf]
    %v108 = vld [vmem:[#allocation5 + $0x150] sm:$0xff]
    %v109 = vld [vmem:[#allocation5 + $0x158] sm:$0xff]
    %v110 = vld [vmem:[#allocation5 + $0x160] sm:$0xff]
    %v111 = vld [vmem:[#allocation5 + $0x168] sm:$0xf]
    %v112 = vld [vmem:[#allocation5 + $0x16c] sm:$0xff]
    %v113 = vld [vmem:[#allocation5 + $0x174] sm:$0xff]
    %v114 = vld [vmem:[#allocation5 + $0x17c] sm:$0xff]
    %v115 = vld [vmem:[#allocation5 + $0x184] sm:$0xf]
    %v116 = vld [vmem:[#allocation5 + $0x188] sm:$0xff]
    %v117 = vld [vmem:[#allocation5 + $0x190] sm:$0xff]
    %v118 = vld [vmem:[#allocation5 + $0x198] sm:$0xff]
    %v119 = vld [vmem:[#allocation5 + $0x1a0] sm:$0xf]
    %v120 = vld [vmem:[#allocation5 + $0x1a4] sm:$0xff]
    %v121 = vld [vmem:[#allocation5 + $0x1ac] sm:$0xff]
    %v122 = vld [vmem:[#allocation5 + $0x1b4] sm:$0xff]
    %v123 = vld [vmem:[#allocation5 + $0x1bc] sm:$0xf]
    %v124 = vld [vmem:[#allocation5 + $0x1c0] sm:$0xff]
    %v125 = vld [vmem:[#allocation5 + $0x1c8] sm:$0xff]
    %v126 = vld [vmem:[#allocation5 + $0x1d0] sm:$0xff]
    %v127 = vld [vmem:[#allocation5 + $0x1d8] sm:$0xf]
    %v128 = vld [vmem:[#allocation5 + $0x1dc] sm:$0xff]
    %v129 = vld [vmem:[#allocation5 + $0x1e4] sm:$0xff]
    %v130 = vld [vmem:[#allocation5 + $0x1ec] sm:$0xff]
    %v131 = vld [vmem:[#allocation5 + $0x1f4] sm:$0xf]
    %v132 = vld [vmem:[#allocation5 + $0x1f8] sm:$0xff]
    %v133 = vld [vmem:[#allocation5 + $0x200] sm:$0xff]
    %v134 = vld [vmem:[#allocation5 + $0x208] sm:$0xff]
    %v135 = vld [vmem:[#allocation5 + $0x210] sm:$0xf]
    %v136 = vld [vmem:[#allocation5 + $0x214] sm:$0xff]
    %v137 = vld [vmem:[#allocation5 + $0x21c] sm:$0xff]
    %v138 = vld [vmem:[#allocation5 + $0x224] sm:$0xff]
    %v139 = vld [vmem:[#allocation5 + $0x22c] sm:$0xf]
    %v140 = vld [vmem:[#allocation5 + $0x230] sm:$0xff]
    %v141 = vld [vmem:[#allocation5 + $0x238] sm:$0xff]
    %v142 = vld [vmem:[#allocation5 + $0x240] sm:$0xff]
    %v143 = vld [vmem:[#allocation5 + $0x248] sm:$0xf]
    %v144 = vld [vmem:[#allocation5 + $0x24c] sm:$0xff]
    %v145 = vld [vmem:[#allocation5 + $0x254] sm:$0xff]
    %v146 = vld [vmem:[#allocation5 + $0x25c] sm:$0xff]
    %v147 = vld [vmem:[#allocation5 + $0x264] sm:$0xf]
    %v148 = vld [vmem:[#allocation5 + $0x268] sm:$0xff]
    %v149 = vld [vmem:[#allocation5 + $0x270] sm:$0xff]
    %v150 = vld [vmem:[#allocation5 + $0x278] sm:$0xff]
    %v151 = vld [vmem:[#allocation5 + $0x280] sm:$0xf]
    %v152 = vld [vmem:[#allocation5 + $0x284] sm:$0xff]
    %v153 = vld [vmem:[#allocation5 + $0x28c] sm:$0xff]
    %v154 = vld [vmem:[#allocation5 + $0x294] sm:$0xff]
    %v155 = vld [vmem:[#allocation5 + $0x29c] sm:$0xf]
    %v156 = vld [vmem:[#allocation5 + $0x2a0] sm:$0xff]
    %v157 = vld [vmem:[#allocation5 + $0x2a8] sm:$0xff]
    %v158 = vld [vmem:[#allocation5 + $0x2b0] sm:$0xff]
    %v159 = vld [vmem:[#allocation5 + $0x2b8] sm:$0xf]
    %v160 = vld [vmem:[#allocation5 + $0x2bc] sm:$0xff]
    %v161 = vld [vmem:[#allocation5 + $0x2c4] sm:$0xff]
    %v162 = vld [vmem:[#allocation5 + $0x2cc] sm:$0xff]
    %v163 = vld [vmem:[#allocation5 + $0x2d4] sm:$0xf]
    %v164 = vld [vmem:[#allocation5 + $0x2d8] sm:$0xff]
    %v165 = vld [vmem:[#allocation5 + $0x2e0] sm:$0xff]
    %v166 = vld [vmem:[#allocation5 + $0x2e8] sm:$0xff]
    %v167 = vld [vmem:[#allocation5 + $0x2f0] sm:$0xf]
    %v168 = vld [vmem:[#allocation5 + $0x2f4] sm:$0xff]
    %v169 = vld [vmem:[#allocation5 + $0x2fc] sm:$0xff]
    %v170 = vld [vmem:[#allocation5 + $0x304] sm:$0xff]
    %v171 = vld [vmem:[#allocation5 + $0x30c] sm:$0xf]
    %v172 = vld [vmem:[#allocation5 + $0x310] sm:$0xff]
    %v173 = vld [vmem:[#allocation5 + $0x318] sm:$0xff]
    %v174 = vld [vmem:[#allocation5 + $0x320] sm:$0xff]
    %v175 = vld [vmem:[#allocation5 + $0x328] sm:$0xf]
    %v176 = vld [vmem:[#allocation5 + $0x32c] sm:$0xff]
    %v177 = vld [vmem:[#allocation5 + $0x334] sm:$0xff]
    %v178 = vld [vmem:[#allocation5 + $0x33c] sm:$0xff]
    %v179 = vld [vmem:[#allocation5 + $0x344] sm:$0xf]
    %v180 = vld [vmem:[#allocation5 + $0x348] sm:$0xff]
    %v181 = vld [vmem:[#allocation5 + $0x350] sm:$0xff]
    %v182 = vld [vmem:[#allocation5 + $0x358] sm:$0xff]
    %v183 = vld [vmem:[#allocation5 + $0x360] sm:$0xf]
    %v184 = vld [vmem:[#allocation5 + $0x364] sm:$0xff]
    %v185 = vld [vmem:[#allocation5 + $0x36c] sm:$0xff]
    %v186 = vld [vmem:[#allocation5 + $0x374] sm:$0xff]
    %v187 = vld [vmem:[#allocation5 + $0x37c] sm:$0xf]
    %v188 = vld [vmem:[#allocation5 + $0x380] sm:$0xff]
    %v189 = vld [vmem:[#allocation5 + $0x388] sm:$0xff]
    %v190 = vld [vmem:[#allocation5 + $0x390] sm:$0xff]
    %v191 = vld [vmem:[#allocation5 + $0x398] sm:$0xf]
    %v192 = vld [vmem:[#allocation5 + $0x39c] sm:$0xff]
    %v193 = vld [vmem:[#allocation5 + $0x3a4] sm:$0xff]
    %v194 = vld [vmem:[#allocation5 + $0x3ac] sm:$0xff]
    %v195 = vld [vmem:[#allocation5 + $0x3b4] sm:$0xf]
    %v196 = vld [vmem:[#allocation5 + $0x3b8] sm:$0xff]
    %v197 = vld [vmem:[#allocation5 + $0x3c0] sm:$0xff]
    %v198 = vld [vmem:[#allocation5 + $0x3c8] sm:$0xff]
    %v199 = vld [vmem:[#allocation5 + $0x3d0] sm:$0xf]
    %v200 = vld [vmem:[#allocation5 + $0x3d4] sm:$0xff]
    %v201 = vld [vmem:[#allocation5 + $0x3dc] sm:$0xff]
    %v202 = vld [vmem:[#allocation5 + $0x3e4] sm:$0xff]
    %v203 = vld [vmem:[#allocation5 + $0x3ec] sm:$0xf]
    %v204 = vld [vmem:[#allocation5 + $0x3f0] sm:$0xff]
    %v205 = vld [vmem:[#allocation5 + $0x3f8] sm:$0xff]
    %v206 = vld [vmem:[#allocation5 + $0x400] sm:$0xff]
    %v207 = vld [vmem:[#allocation5 + $0x408] sm:$0xf]
    %v208 = vld [vmem:[#allocation5 + $0x40c] sm:$0xff]
    %v209 = vld [vmem:[#allocation5 + $0x414] sm:$0xff]
    %v210 = vld [vmem:[#allocation5 + $0x41c] sm:$0xff]
    %v211 = vld [vmem:[#allocation5 + $0x424] sm:$0xf]
    %v212 = vld [vmem:[#allocation5 + $0x428] sm:$0xff]
    %v213 = vld [vmem:[#allocation5 + $0x430] sm:$0xff]
    %v214 = vld [vmem:[#allocation5 + $0x438] sm:$0xff]
    %v215 = vld [vmem:[#allocation5 + $0x440] sm:$0xf]
    %v216 = vld [vmem:[#allocation5 + $0x444] sm:$0xff]
    %v217 = vld [vmem:[#allocation5 + $0x44c] sm:$0xff]
    %v218 = vld [vmem:[#allocation5 + $0x454] sm:$0xff]
    %v219 = vld [vmem:[#allocation5 + $0x45c] sm:$0xf]
    %v220 = vld [vmem:[#allocation5 + $0x460] sm:$0xff]
    %v221 = vld [vmem:[#allocation5 + $0x468] sm:$0xff]
    %v222 = vld [vmem:[#allocation5 + $0x470] sm:$0xff]
    %v223 = vld [vmem:[#allocation5 + $0x478] sm:$0xf]
    %v224 = vld [vmem:[#allocation5 + $0x47c] sm:$0xff]
    %v225 = vld [vmem:[#allocation5 + $0x484] sm:$0xff]
    %v226 = vld [vmem:[#allocation5 + $0x48c] sm:$0xff]
    %v227 = vld [vmem:[#allocation5 + $0x494] sm:$0xf]
    %v228 = vld [vmem:[#allocation5 + $0x498] sm:$0xff]
    %v229 = vld [vmem:[#allocation5 + $0x4a0] sm:$0xff]
    %v230 = vld [vmem:[#allocation5 + $0x4a8] sm:$0xff]
    %v231 = vld [vmem:[#allocation5 + $0x4b0] sm:$0xf]
    %v232 = vld [vmem:[#allocation5 + $0x4b4] sm:$0xff]
    %v233 = vld [vmem:[#allocation5 + $0x4bc] sm:$0xff]
    %v234 = vld [vmem:[#allocation5 + $0x4c4] sm:$0xff]
    %v235 = vld [vmem:[#allocation5 + $0x4cc] sm:$0xf]
    %v236 = vld [vmem:[#allocation5 + $0x4d0] sm:$0xff]
    %v237 = vld [vmem:[#allocation5 + $0x4d8] sm:$0xff]
    %v238 = vld [vmem:[#allocation5 + $0x4e0] sm:$0xff]
    %v239 = vld [vmem:[#allocation5 + $0x4e8] sm:$0xf]
    %v240 = vld [vmem:[#allocation5 + $0x4ec] sm:$0xff]
    %v241 = vld [vmem:[#allocation5 + $0x4f4] sm:$0xff]
    %v242 = vld [vmem:[#allocation5 + $0x4fc] sm:$0xff]
    %v243 = vld [vmem:[#allocation5 + $0x504] sm:$0xf]
    %v244 = vld [vmem:[#allocation5 + $0x508] sm:$0xff]
    %v245 = vld [vmem:[#allocation5 + $0x510] sm:$0xff]
    %v246 = vld [vmem:[#allocation5 + $0x518] sm:$0xff]
    %v247 = vld [vmem:[#allocation5 + $0x520] sm:$0xf]
    %v248 = vld [vmem:[#allocation5 + $0x524] sm:$0xff]
    %v249 = vld [vmem:[#allocation5 + $0x52c] sm:$0xff]
    %v250 = vld [vmem:[#allocation5 + $0x534] sm:$0xff]
    %v251 = vld [vmem:[#allocation5 + $0x53c] sm:$0xf]
    %v252 = vld [vmem:[#allocation7] sm:$0xff]
    %v254 = vperm.slane %v252, 0
    %v255 = vperm.slane %v252, 1
    %v256 = vperm.slane %v252, 2
    %v257 = vperm.slane %v252, 3
    %v258 = vperm.slane %v252, 4
    %v259 = vperm.slane %v252, 5
    %v260 = vperm.slane %v252, 6
    %v270 = vunpack.c.l.b16 %v58
    %v271 = vunpack.c.h.b16 %v58
    %v272 = vunpack.c.l.b16 %v59
    %v273 = vpack.c.b16 %v270, %v270
    %v274 = vpack.c.b16 %v271, %v271
    %v275 = vpack.c.b16 %v272, %v272
    %v471 = vunpack.c.l.b16 %v60
    %v472 = vunpack.c.h.b16 %v60
    %v473 = vunpack.c.l.b16 %v61
    %v474 = vunpack.c.h.b16 %v61
    %v475 = vunpack.c.l.b16 %v62
    %v476 = vunpack.c.h.b16 %v62
    %v477 = vunpack.c.l.b16 %v63
    %v478 = vunpack.c.l.b16 %v64
    %v479 = vunpack.c.h.b16 %v64
    %v480 = vunpack.c.l.b16 %v65
    %v481 = vunpack.c.h.b16 %v65
    %v482 = vunpack.c.l.b16 %v66
    %v483 = vunpack.c.h.b16 %v66
    %v484 = vunpack.c.l.b16 %v67
    %v485 = vunpack.c.l.b16 %v68
    %v486 = vunpack.c.h.b16 %v68
    %v487 = vunpack.c.l.b16 %v69
    %v488 = vunpack.c.h.b16 %v69
    %v489 = vunpack.c.l.b16 %v70
    %v490 = vunpack.c.h.b16 %v70
    %v491 = vunpack.c.l.b16 %v71
    %v492 = vunpack.c.l.b16 %v72
    %v493 = vunpack.c.h.b16 %v72
    %v494 = vunpack.c.l.b16 %v73
    %v495 = vunpack.c.h.b16 %v73
    %v496 = vunpack.c.l.b16 %v74
    %v497 = vunpack.c.h.b16 %v74
    %v498 = vunpack.c.l.b16 %v75
    %v499 = vunpack.c.l.b16 %v76
    %v500 = vunpack.c.h.b16 %v76
    %v501 = vunpack.c.l.b16 %v77
    %v502 = vunpack.c.h.b16 %v77
    %v503 = vunpack.c.l.b16 %v78
    %v504 = vunpack.c.h.b16 %v78
    %v505 = vunpack.c.l.b16 %v79
    %v506 = vunpack.c.l.b16 %v80
    %v507 = vunpack.c.h.b16 %v80
    %v508 = vunpack.c.l.b16 %v81
    %v509 = vunpack.c.h.b16 %v81
    %v510 = vunpack.c.l.b16 %v82
    %v511 = vunpack.c.h.b16 %v82
    %v512 = vunpack.c.l.b16 %v83
    %v513 = vunpack.c.l.b16 %v84
    %v514 = vunpack.c.h.b16 %v84
    %v515 = vunpack.c.l.b16 %v85
    %v516 = vunpack.c.h.b16 %v85
    %v517 = vunpack.c.l.b16 %v86
    %v518 = vunpack.c.h.b16 %v86
    %v519 = vunpack.c.l.b16 %v87
    %v520 = vunpack.c.l.b16 %v88
    %v521 = vunpack.c.h.b16 %v88
    %v522 = vunpack.c.l.b16 %v89
    %v523 = vunpack.c.h.b16 %v89
    %v524 = vunpack.c.l.b16 %v90
    %v525 = vunpack.c.h.b16 %v90
    %v526 = vunpack.c.l.b16 %v91
    %v527 = vunpack.c.l.b16 %v92
    %v528 = vunpack.c.h.b16 %v92
    %v529 = vunpack.c.l.b16 %v93
    %v530 = vunpack.c.h.b16 %v93
    %v531 = vunpack.c.l.b16 %v94
    %v532 = vunpack.c.h.b16 %v94
    %v533 = vunpack.c.l.b16 %v95
    %v534 = vunpack.c.l.b16 %v96
    %v535 = vunpack.c.h.b16 %v96
    %v536 = vunpack.c.l.b16 %v97
    %v537 = vunpack.c.h.b16 %v97
    %v538 = vunpack.c.l.b16 %v98
    %v539 = vunpack.c.h.b16 %v98
    %v540 = vunpack.c.l.b16 %v99
    %v541 = vunpack.c.l.b16 %v100
    %v542 = vunpack.c.h.b16 %v100
    %v543 = vunpack.c.l.b16 %v101
    %v544 = vunpack.c.h.b16 %v101
    %v545 = vunpack.c.l.b16 %v102
    %v546 = vunpack.c.h.b16 %v102
    %v547 = vunpack.c.l.b16 %v103
    %v548 = vunpack.c.l.b16 %v104
    %v549 = vunpack.c.h.b16 %v104
    %v550 = vunpack.c.l.b16 %v105
    %v551 = vunpack.c.h.b16 %v105
    %v552 = vunpack.c.l.b16 %v106
    %v553 = vunpack.c.h.b16 %v106
    %v554 = vunpack.c.l.b16 %v107
    %v555 = vunpack.c.l.b16 %v108
    %v556 = vunpack.c.h.b16 %v108
    %v557 = vunpack.c.l.b16 %v109
    %v558 = vunpack.c.h.b16 %v109
    %v559 = vunpack.c.l.b16 %v110
    %v560 = vunpack.c.h.b16 %v110
    %v561 = vunpack.c.l.b16 %v111
    %v562 = vunpack.c.l.b16 %v112
    %v563 = vunpack.c.h.b16 %v112
    %v564 = vunpack.c.l.b16 %v113
    %v565 = vunpack.c.h.b16 %v113
    %v566 = vunpack.c.l.b16 %v114
    %v567 = vunpack.c.h.b16 %v114
    %v568 = vunpack.c.l.b16 %v115
    %v569 = vunpack.c.l.b16 %v116
    %v570 = vunpack.c.h.b16 %v116
    %v571 = vunpack.c.l.b16 %v117
    %v572 = vunpack.c.h.b16 %v117
    %v573 = vunpack.c.l.b16 %v118
    %v574 = vunpack.c.h.b16 %v118
    %v575 = vunpack.c.l.b16 %v119
    %v576 = vunpack.c.l.b16 %v120
    %v577 = vunpack.c.h.b16 %v120
    %v578 = vunpack.c.l.b16 %v121
    %v579 = vunpack.c.h.b16 %v121
    %v580 = vunpack.c.l.b16 %v122
    %v581 = vunpack.c.h.b16 %v122
    %v582 = vunpack.c.l.b16 %v123
    %v583 = vunpack.c.l.b16 %v124
    %v584 = vunpack.c.h.b16 %v124
    %v585 = vunpack.c.l.b16 %v125
    %v586 = vunpack.c.h.b16 %v125
    %v587 = vunpack.c.l.b16 %v126
    %v588 = vunpack.c.h.b16 %v126
    %v589 = vunpack.c.l.b16 %v127
    %v590 = vunpack.c.l.b16 %v128
    %v591 = vunpack.c.h.b16 %v128
    %v592 = vunpack.c.l.b16 %v129
    %v593 = vunpack.c.h.b16 %v129
    %v594 = vunpack.c.l.b16 %v130
    %v595 = vunpack.c.h.b16 %v130
    %v596 = vunpack.c.l.b16 %v131
    %v597 = vunpack.c.l.b16 %v132
    %v598 = vunpack.c.h.b16 %v132
    %v599 = vunpack.c.l.b16 %v133
    %v600 = vunpack.c.h.b16 %v133
    %v601 = vunpack.c.l.b16 %v134
    %v602 = vunpack.c.h.b16 %v134
    %v603 = vunpack.c.l.b16 %v135
    %v604 = vunpack.c.l.b16 %v136
    %v605 = vunpack.c.h.b16 %v136
    %v606 = vunpack.c.l.b16 %v137
    %v607 = vunpack.c.h.b16 %v137
    %v608 = vunpack.c.l.b16 %v138
    %v609 = vunpack.c.h.b16 %v138
    %v610 = vunpack.c.l.b16 %v139
    %v611 = vunpack.c.l.b16 %v140
    %v612 = vunpack.c.h.b16 %v140
    %v613 = vunpack.c.l.b16 %v141
    %v614 = vunpack.c.h.b16 %v141
    %v615 = vunpack.c.l.b16 %v142
    %v616 = vunpack.c.h.b16 %v142
    %v617 = vunpack.c.l.b16 %v143
    %v618 = vunpack.c.l.b16 %v144
    %v619 = vunpack.c.h.b16 %v144
    %v620 = vunpack.c.l.b16 %v145
    %v621 = vunpack.c.h.b16 %v145
    %v622 = vunpack.c.l.b16 %v146
    %v623 = vunpack.c.h.b16 %v146
    %v624 = vunpack.c.l.b16 %v147
    %v625 = vunpack.c.l.b16 %v148
    %v626 = vunpack.c.h.b16 %v148
    %v627 = vunpack.c.l.b16 %v149
    %v628 = vunpack.c.h.b16 %v149
    %v629 = vunpack.c.l.b16 %v150
    %v630 = vunpack.c.h.b16 %v150
    %v631 = vunpack.c.l.b16 %v151
    %v632 = vunpack.c.l.b16 %v152
    %v633 = vunpack.c.h.b16 %v152
    %v634 = vunpack.c.l.b16 %v153
    %v635 = vunpack.c.h.b16 %v153
    %v636 = vunpack.c.l.b16 %v154
    %v637 = vunpack.c.h.b16 %v154
    %v638 = vunpack.c.l.b16 %v155
    %v639 = vunpack.c.l.b16 %v156
    %v640 = vunpack.c.h.b16 %v156
    %v641 = vunpack.c.l.b16 %v157
    %v642 = vunpack.c.h.b16 %v157
    %v643 = vunpack.c.l.b16 %v158
    %v644 = vunpack.c.h.b16 %v158
    %v645 = vunpack.c.l.b16 %v159
    %v646 = vunpack.c.l.b16 %v160
    %v647 = vunpack.c.h.b16 %v160
    %v648 = vunpack.c.l.b16 %v161
    %v649 = vunpack.c.h.b16 %v161
    %v650 = vunpack.c.l.b16 %v162
    %v651 = vunpack.c.h.b16 %v162
    %v652 = vunpack.c.l.b16 %v163
    %v653 = vunpack.c.l.b16 %v164
    %v654 = vunpack.c.h.b16 %v164
    %v655 = vunpack.c.l.b16 %v165
    %v656 = vunpack.c.h.b16 %v165
    %v657 = vunpack.c.l.b16 %v166
    %v658 = vunpack.c.h.b16 %v166
    %v659 = vunpack.c.l.b16 %v167
    %v660 = vunpack.c.l.b16 %v168
    %v661 = vunpack.c.h.b16 %v168
    %v662 = vunpack.c.l.b16 %v169
    %v663 = vunpack.c.h.b16 %v169
    %v664 = vunpack.c.l.b16 %v170
    %v665 = vunpack.c.h.b16 %v170
    %v666 = vunpack.c.l.b16 %v171
    %v667 = vunpack.c.l.b16 %v172
    %v668 = vunpack.c.h.b16 %v172
    %v669 = vunpack.c.l.b16 %v173
    %v670 = vunpack.c.h.b16 %v173
    %v671 = vunpack.c.l.b16 %v174
    %v672 = vunpack.c.h.b16 %v174
    %v673 = vunpack.c.l.b16 %v175
    %v674 = vunpack.c.l.b16 %v176
    %v675 = vunpack.c.h.b16 %v176
    %v676 = vunpack.c.l.b16 %v177
    %v677 = vunpack.c.h.b16 %v177
    %v678 = vunpack.c.l.b16 %v178
    %v679 = vunpack.c.h.b16 %v178
    %v680 = vunpack.c.l.b16 %v179
    %v681 = vunpack.c.l.b16 %v180
    %v682 = vunpack.c.h.b16 %v180
    %v683 = vunpack.c.l.b16 %v181
    %v684 = vunpack.c.h.b16 %v181
    %v685 = vunpack.c.l.b16 %v182
    %v686 = vunpack.c.h.b16 %v182
    %v687 = vunpack.c.l.b16 %v183
    %v688 = vunpack.c.l.b16 %v184
    %v689 = vunpack.c.h.b16 %v184
    %v690 = vunpack.c.l.b16 %v185
    %v691 = vunpack.c.h.b16 %v185
    %v692 = vunpack.c.l.b16 %v186
    %v693 = vunpack.c.h.b16 %v186
    %v694 = vunpack.c.l.b16 %v187
    %v695 = vunpack.c.l.b16 %v188
    %v696 = vunpack.c.h.b16 %v188
    %v697 = vunpack.c.l.b16 %v189
    %v698 = vunpack.c.h.b16 %v189
    %v699 = vunpack.c.l.b16 %v190
    %v700 = vunpack.c.h.b16 %v190
    %v701 = vunpack.c.l.b16 %v191
    %v702 = vunpack.c.l.b16 %v192
    %v703 = vunpack.c.h.b16 %v192
    %v704 = vunpack.c.l.b16 %v193
    %v705 = vunpack.c.h.b16 %v193
    %v706 = vunpack.c.l.b16 %v194
    %v707 = vunpack.c.h.b16 %v194
    %v708 = vunpack.c.l.b16 %v195
    %v709 = vunpack.c.l.b16 %v196
    %v710 = vunpack.c.h.b16 %v196
    %v711 = vunpack.c.l.b16 %v197
    %v712 = vunpack.c.h.b16 %v197
    %v713 = vunpack.c.l.b16 %v198
    %v714 = vunpack.c.h.b16 %v198
    %v715 = vunpack.c.l.b16 %v199
    %v716 = vunpack.c.l.b16 %v200
    %v717 = vunpack.c.h.b16 %v200
    %v718 = vunpack.c.l.b16 %v201
    %v719 = vunpack.c.h.b16 %v201
    %v720 = vunpack.c.l.b16 %v202
    %v721 = vunpack.c.h.b16 %v202
    %v722 = vunpack.c.l.b16 %v203
    %v723 = vunpack.c.l.b16 %v204
    %v724 = vunpack.c.h.b16 %v204
    %v725 = vunpack.c.l.b16 %v205
    %v726 = vunpack.c.h.b16 %v205
    %v727 = vunpack.c.l.b16 %v206
    %v728 = vunpack.c.h.b16 %v206
    %v729 = vunpack.c.l.b16 %v207
    %v730 = vunpack.c.l.b16 %v208
    %v731 = vunpack.c.h.b16 %v208
    %v732 = vunpack.c.l.b16 %v209
    %v733 = vunpack.c.h.b16 %v209
    %v734 = vunpack.c.l.b16 %v210
    %v735 = vunpack.c.h.b16 %v210
    %v736 = vunpack.c.l.b16 %v211
    %v737 = vunpack.c.l.b16 %v212
    %v738 = vunpack.c.h.b16 %v212
    %v739 = vunpack.c.l.b16 %v213
    %v740 = vunpack.c.h.b16 %v213
    %v741 = vunpack.c.l.b16 %v214
    %v742 = vunpack.c.h.b16 %v214
    %v743 = vunpack.c.l.b16 %v215
    %v744 = vunpack.c.l.b16 %v216
    %v745 = vunpack.c.h.b16 %v216
    %v746 = vunpack.c.l.b16 %v217
    %v747 = vunpack.c.h.b16 %v217
    %v748 = vunpack.c.l.b16 %v218
    %v749 = vunpack.c.h.b16 %v218
    %v750 = vunpack.c.l.b16 %v219
    %v751 = vunpack.c.l.b16 %v220
    %v752 = vunpack.c.h.b16 %v220
    %v753 = vunpack.c.l.b16 %v221
    %v754 = vunpack.c.h.b16 %v221
    %v755 = vunpack.c.l.b16 %v222
    %v756 = vunpack.c.h.b16 %v222
    %v757 = vunpack.c.l.b16 %v223
    %v758 = vunpack.c.l.b16 %v224
    %v759 = vunpack.c.h.b16 %v224
    %v760 = vunpack.c.l.b16 %v225
    %v761 = vunpack.c.h.b16 %v225
    %v762 = vunpack.c.l.b16 %v226
    %v763 = vunpack.c.h.b16 %v226
    %v764 = vunpack.c.l.b16 %v227
    %v765 = vunpack.c.l.b16 %v228
    %v766 = vunpack.c.h.b16 %v228
    %v767 = vunpack.c.l.b16 %v229
    %v768 = vunpack.c.h.b16 %v229
    %v769 = vunpack.c.l.b16 %v230
    %v770 = vunpack.c.h.b16 %v230
    %v771 = vunpack.c.l.b16 %v231
    %v772 = vunpack.c.l.b16 %v232
    %v773 = vunpack.c.h.b16 %v232
    %v774 = vunpack.c.l.b16 %v233
    %v775 = vunpack.c.h.b16 %v233
    %v776 = vunpack.c.l.b16 %v234
    %v777 = vunpack.c.h.b16 %v234
    %v778 = vunpack.c.l.b16 %v235
    %v779 = vunpack.c.l.b16 %v236
    %v780 = vunpack.c.h.b16 %v236
    %v781 = vunpack.c.l.b16 %v237
    %v782 = vunpack.c.h.b16 %v237
    %v783 = vunpack.c.l.b16 %v238
    %v784 = vunpack.c.h.b16 %v238
    %v785 = vunpack.c.l.b16 %v239
    %v786 = vunpack.c.l.b16 %v240
    %v787 = vunpack.c.h.b16 %v240
    %v788 = vunpack.c.l.b16 %v241
    %v789 = vunpack.c.h.b16 %v241
    %v790 = vunpack.c.l.b16 %v242
    %v791 = vunpack.c.h.b16 %v242
    %v792 = vunpack.c.l.b16 %v243
    %v793 = vunpack.c.l.b16 %v244
    %v794 = vunpack.c.h.b16 %v244
    %v795 = vunpack.c.l.b16 %v245
    %v796 = vunpack.c.h.b16 %v245
    %v797 = vunpack.c.l.b16 %v246
    %v798 = vunpack.c.h.b16 %v246
    %v799 = vunpack.c.l.b16 %v247
    %v800 = vunpack.c.l.b16 %v248
    %v801 = vunpack.c.h.b16 %v248
    %v802 = vunpack.c.l.b16 %v249
    %v803 = vunpack.c.h.b16 %v249
    %v804 = vunpack.c.l.b16 %v250
    %v805 = vunpack.c.h.b16 %v250
    %v806 = vunpack.c.l.b16 %v251
    %v807 = vpack.c.b16 %v478, %v471
    %v808 = vpack.c.b16 %v479, %v472
    %v809 = vpack.c.b16 %v480, %v473
    %v810 = vpack.c.b16 %v481, %v474
    %v811 = vpack.c.b16 %v482, %v475
    %v812 = vpack.c.b16 %v483, %v476
    %v813 = vpack.c.b16 %v484, %v477
    %v814 = vpack.c.b16 %v492, %v485
    %v815 = vpack.c.b16 %v493, %v486
    %v816 = vpack.c.b16 %v494, %v487
    %v817 = vpack.c.b16 %v495, %v488
    %v818 = vpack.c.b16 %v496, %v489
    %v819 = vpack.c.b16 %v497, %v490
    %v820 = vpack.c.b16 %v498, %v491
    %v821 = vpack.c.b16 %v506, %v499
    %v822 = vpack.c.b16 %v507, %v500
    %v823 = vpack.c.b16 %v508, %v501
    %v824 = vpack.c.b16 %v509, %v502
    %v825 = vpack.c.b16 %v510, %v503
    %v826 = vpack.c.b16 %v511, %v504
    %v827 = vpack.c.b16 %v512, %v505
    %v828 = vpack.c.b16 %v520, %v513
    %v829 = vpack.c.b16 %v521, %v514
    %v830 = vpack.c.b16 %v522, %v515
    %v831 = vpack.c.b16 %v523, %v516
    %v832 = vpack.c.b16 %v524, %v517
    %v833 = vpack.c.b16 %v525, %v518
    %v834 = vpack.c.b16 %v526, %v519
    %v835 = vpack.c.b16 %v534, %v527
    %v836 = vpack.c.b16 %v535, %v528
    %v837 = vpack.c.b16 %v536, %v529
    %v838 = vpack.c.b16 %v537, %v530
    %v839 = vpack.c.b16 %v538, %v531
    %v840 = vpack.c.b16 %v539, %v532
    %v841 = vpack.c.b16 %v540, %v533
    %v842 = vpack.c.b16 %v548, %v541
    %v843 = vpack.c.b16 %v549, %v542
    %v844 = vpack.c.b16 %v550, %v543
    %v845 = vpack.c.b16 %v551, %v544
    %v846 = vpack.c.b16 %v552, %v545
    %v847 = vpack.c.b16 %v553, %v546
    %v848 = vpack.c.b16 %v554, %v547
    %v849 = vpack.c.b16 %v562, %v555
    %v850 = vpack.c.b16 %v563, %v556
    %v851 = vpack.c.b16 %v564, %v557
    %v852 = vpack.c.b16 %v565, %v558
    %v853 = vpack.c.b16 %v566, %v559
    %v854 = vpack.c.b16 %v567, %v560
    %v855 = vpack.c.b16 %v568, %v561
    %v856 = vpack.c.b16 %v576, %v569
    %v857 = vpack.c.b16 %v577, %v570
    %v858 = vpack.c.b16 %v578, %v571
    %v859 = vpack.c.b16 %v579, %v572
    %v860 = vpack.c.b16 %v580, %v573
    %v861 = vpack.c.b16 %v581, %v574
    %v862 = vpack.c.b16 %v582, %v575
    %v863 = vpack.c.b16 %v590, %v583
    %v864 = vpack.c.b16 %v591, %v584
    %v865 = vpack.c.b16 %v592, %v585
    %v866 = vpack.c.b16 %v593, %v586
    %v867 = vpack.c.b16 %v594, %v587
    %v868 = vpack.c.b16 %v595, %v588
    %v869 = vpack.c.b16 %v596, %v589
    %v870 = vpack.c.b16 %v604, %v597
    %v871 = vpack.c.b16 %v605, %v598
    %v872 = vpack.c.b16 %v606, %v599
    %v873 = vpack.c.b16 %v607, %v600
    %v874 = vpack.c.b16 %v608, %v601
    %v875 = vpack.c.b16 %v609, %v602
    %v876 = vpack.c.b16 %v610, %v603
    %v877 = vpack.c.b16 %v618, %v611
    %v878 = vpack.c.b16 %v619, %v612
    %v879 = vpack.c.b16 %v620, %v613
    %v880 = vpack.c.b16 %v621, %v614
    %v881 = vpack.c.b16 %v622, %v615
    %v882 = vpack.c.b16 %v623, %v616
    %v883 = vpack.c.b16 %v624, %v617
    %v884 = vpack.c.b16 %v632, %v625
    %v885 = vpack.c.b16 %v633, %v626
    %v886 = vpack.c.b16 %v634, %v627
    %v887 = vpack.c.b16 %v635, %v628
    %v888 = vpack.c.b16 %v636, %v629
    %v889 = vpack.c.b16 %v637, %v630
    %v890 = vpack.c.b16 %v638, %v631
    %v891 = vpack.c.b16 %v646, %v639
    %v892 = vpack.c.b16 %v647, %v640
    %v893 = vpack.c.b16 %v648, %v641
    %v894 = vpack.c.b16 %v649, %v642
    %v895 = vpack.c.b16 %v650, %v643
    %v896 = vpack.c.b16 %v651, %v644
    %v897 = vpack.c.b16 %v652, %v645
    %v898 = vpack.c.b16 %v660, %v653
    %v899 = vpack.c.b16 %v661, %v654
    %v900 = vpack.c.b16 %v662, %v655
    %v901 = vpack.c.b16 %v663, %v656
    %v902 = vpack.c.b16 %v664, %v657
    %v903 = vpack.c.b16 %v665, %v658
    %v904 = vpack.c.b16 %v666, %v659
    %v905 = vpack.c.b16 %v674, %v667
    %v906 = vpack.c.b16 %v675, %v668
    %v907 = vpack.c.b16 %v676, %v669
    %v908 = vpack.c.b16 %v677, %v670
    %v909 = vpack.c.b16 %v678, %v671
    %v910 = vpack.c.b16 %v679, %v672
    %v911 = vpack.c.b16 %v680, %v673
    %v912 = vpack.c.b16 %v688, %v681
    %v913 = vpack.c.b16 %v689, %v682
    %v914 = vpack.c.b16 %v690, %v683
    %v915 = vpack.c.b16 %v691, %v684
    %v916 = vpack.c.b16 %v692, %v685
    %v917 = vpack.c.b16 %v693, %v686
    %v918 = vpack.c.b16 %v694, %v687
    %v919 = vpack.c.b16 %v702, %v695
    %v920 = vpack.c.b16 %v703, %v696
    %v921 = vpack.c.b16 %v704, %v697
    %v922 = vpack.c.b16 %v705, %v698
    %v923 = vpack.c.b16 %v706, %v699
    %v924 = vpack.c.b16 %v707, %v700
    %v925 = vpack.c.b16 %v708, %v701
    %v926 = vpack.c.b16 %v716, %v709
    %v927 = vpack.c.b16 %v717, %v710
    %v928 = vpack.c.b16 %v718, %v711
    %v929 = vpack.c.b16 %v719, %v712
    %v930 = vpack.c.b16 %v720, %v713
    %v931 = vpack.c.b16 %v721, %v714
    %v932 = vpack.c.b16 %v722, %v715
    %v933 = vpack.c.b16 %v730, %v723
    %v934 = vpack.c.b16 %v731, %v724
    %v935 = vpack.c.b16 %v732, %v725
    %v936 = vpack.c.b16 %v733, %v726
    %v937 = vpack.c.b16 %v734, %v727
    %v938 = vpack.c.b16 %v735, %v728
    %v939 = vpack.c.b16 %v736, %v729
    %v940 = vpack.c.b16 %v744, %v737
    %v941 = vpack.c.b16 %v745, %v738
    %v942 = vpack.c.b16 %v746, %v739
    %v943 = vpack.c.b16 %v747, %v740
    %v944 = vpack.c.b16 %v748, %v741
    %v945 = vpack.c.b16 %v749, %v742
    %v946 = vpack.c.b16 %v750, %v743
    %v947 = vpack.c.b16 %v758, %v751
    %v948 = vpack.c.b16 %v759, %v752
    %v949 = vpack.c.b16 %v760, %v753
    %v950 = vpack.c.b16 %v761, %v754
    %v951 = vpack.c.b16 %v762, %v755
    %v952 = vpack.c.b16 %v763, %v756
    %v953 = vpack.c.b16 %v764, %v757
    %v954 = vpack.c.b16 %v772, %v765
    %v955 = vpack.c.b16 %v773, %v766
    %v956 = vpack.c.b16 %v774, %v767
    %v957 = vpack.c.b16 %v775, %v768
    %v958 = vpack.c.b16 %v776, %v769
    %v959 = vpack.c.b16 %v777, %v770
    %v960 = vpack.c.b16 %v778, %v771
    %v961 = vpack.c.b16 %v786, %v779
    %v962 = vpack.c.b16 %v787, %v780
    %v963 = vpack.c.b16 %v788, %v781
    %v964 = vpack.c.b16 %v789, %v782
    %v965 = vpack.c.b16 %v790, %v783
    %v966 = vpack.c.b16 %v791, %v784
    %v967 = vpack.c.b16 %v792, %v785
    %v968 = vpack.c.b16 %v800, %v793
    %v969 = vpack.c.b16 %v801, %v794
    %v970 = vpack.c.b16 %v802, %v795
    %v971 = vpack.c.b16 %v803, %v796
    %v972 = vpack.c.b16 %v804, %v797
    %v973 = vpack.c.b16 %v805, %v798
    %v974 = vpack.c.b16 %v806, %v799
    %1143 = vmatpush.bf16.msra.mxu0 %v856
    %1144 = vmatpush.bf16.msra.mxu0 %v849
    %1145 = vmatpush.bf16.msra.mxu0 %v842
    %1146 = vmatpush.bf16.msra.mxu0 %v835
    %1147 = vmatpush.bf16.msra.mxu0 %v828
    %1148 = vmatpush.bf16.msra.mxu0 %v821
    %1149 = vmatpush.bf16.msra.mxu0 %v814
    %1150 = vmatpush.bf16.msra.mxu0 %v807
    %1151 = vmatmul.bf16.gmra.mxu0 %v273
    %v1152 = vpop.f32.mrf.mxu0
    %v1153 = vadd.f32 %v254, %v1152
    %v1154 = vpop.f32.mrf.mxu0
    %1155 = vdwg.mxu0
    %1156 = vmatpush.bf16.msra.mxu0 %v912
    %1157 = vmatpush.bf16.msra.mxu0 %v905
    %1158 = vmatpush.bf16.msra.mxu0 %v898
    %1159 = vmatpush.bf16.msra.mxu0 %v891
    %1160 = vmatpush.bf16.msra.mxu0 %v884
    %1161 = vmatpush.bf16.msra.mxu0 %v877
    %1162 = vmatpush.bf16.msra.mxu0 %v870
    %1163 = vmatpush.bf16.msra.mxu0 %v863
    %1164 = vmatmul.bf16.gmra.mxu0 %v274
    %v1165 = vpop.f32.mrf.mxu0
    %v1166 = vadd.f32 %v1153, %v1165
    %v1167 = vpop.f32.mrf.mxu0
    %1168 = vdwg.mxu0
    %1169 = vmatpush.bf16.msra.mxu0 %v968
    %1170 = vmatpush.bf16.msra.mxu0 %v961
    %1171 = vmatpush.bf16.msra.mxu0 %v954
    %1172 = vmatpush.bf16.msra.mxu0 %v947
    %1173 = vmatpush.bf16.msra.mxu0 %v940
    %1174 = vmatpush.bf16.msra.mxu0 %v933
    %1175 = vmatpush.bf16.msra.mxu0 %v926
    %1176 = vmatpush.bf16.msra.mxu0 %v919
    %1177 = vmatmul.bf16.gmra.mxu0 %v275
    %v1178 = vpop.f32.mrf.mxu0
    %v1179 = vadd.f32 %v1166, %v1178
    %v1180 = vpop.f32.mrf.mxu0
    %1181 = vdwg.mxu0
    %1182 = vmatpush.bf16.msra.mxu0 %v857
    %1183 = vmatpush.bf16.msra.mxu0 %v850
    %1184 = vmatpush.bf16.msra.mxu0 %v843
    %1185 = vmatpush.bf16.msra.mxu0 %v836
    %1186 = vmatpush.bf16.msra.mxu0 %v829
    %1187 = vmatpush.bf16.msra.mxu0 %v822
    %1188 = vmatpush.bf16.msra.mxu0 %v815
    %1189 = vmatpush.bf16.msra.mxu0 %v808
    %1190 = vmatmul.bf16.gmra.mxu0 %v273
    %v1191 = vpop.f32.mrf.mxu0
    %v1192 = vadd.f32 %v255, %v1191
    %v1193 = vpop.f32.mrf.mxu0
    %1194 = vdwg.mxu0
    %1195 = vmatpush.bf16.msra.mxu0 %v913
    %1196 = vmatpush.bf16.msra.mxu0 %v906
    %1197 = vmatpush.bf16.msra.mxu0 %v899
    %1198 = vmatpush.bf16.msra.mxu0 %v892
    %1199 = vmatpush.bf16.msra.mxu0 %v885
    %1200 = vmatpush.bf16.msra.mxu0 %v878
    %1201 = vmatpush.bf16.msra.mxu0 %v871
    %1202 = vmatpush.bf16.msra.mxu0 %v864
    %1203 = vmatmul.bf16.gmra.mxu0 %v274
    %v1204 = vpop.f32.mrf.mxu0
    %v1205 = vadd.f32 %v1192, %v1204
    %v1206 = vpop.f32.mrf.mxu0
    %1207 = vdwg.mxu0
    %1208 = vmatpush.bf16.msra.mxu0 %v969
    %1209 = vmatpush.bf16.msra.mxu0 %v962
    %1210 = vmatpush.bf16.msra.mxu0 %v955
    %1211 = vmatpush.bf16.msra.mxu0 %v948
    %1212 = vmatpush.bf16.msra.mxu0 %v941
    %1213 = vmatpush.bf16.msra.mxu0 %v934
    %1214 = vmatpush.bf16.msra.mxu0 %v927
    %1215 = vmatpush.bf16.msra.mxu0 %v920
    %1216 = vmatmul.bf16.gmra.mxu0 %v275
    %v1217 = vpop.f32.mrf.mxu0
    %v1218 = vadd.f32 %v1205, %v1217
    %v1219 = vpop.f32.mrf.mxu0
    %1220 = vdwg.mxu0
    %1221 = vmatpush.bf16.msra.mxu0 %v858
    %1222 = vmatpush.bf16.msra.mxu0 %v851
    %1223 = vmatpush.bf16.msra.mxu0 %v844
    %1224 = vmatpush.bf16.msra.mxu0 %v837
    %1225 = vmatpush.bf16.msra.mxu0 %v830
    %1226 = vmatpush.bf16.msra.mxu0 %v823
    %1227 = vmatpush.bf16.msra.mxu0 %v816
    %1228 = vmatpush.bf16.msra.mxu0 %v809
    %1229 = vmatmul.bf16.gmra.mxu0 %v273
    %v1230 = vpop.f32.mrf.mxu0
    %v1231 = vadd.f32 %v256, %v1230
    %v1232 = vpop.f32.mrf.mxu0
    %1233 = vdwg.mxu0
    %1234 = vmatpush.bf16.msra.mxu0 %v914
    %1235 = vmatpush.bf16.msra.mxu0 %v907
    %1236 = vmatpush.bf16.msra.mxu0 %v900
    %1237 = vmatpush.bf16.msra.mxu0 %v893
    %1238 = vmatpush.bf16.msra.mxu0 %v886
    %1239 = vmatpush.bf16.msra.mxu0 %v879
    %1240 = vmatpush.bf16.msra.mxu0 %v872
    %1241 = vmatpush.bf16.msra.mxu0 %v865
    %1242 = vmatmul.bf16.gmra.mxu0 %v274
    %v1243 = vpop.f32.mrf.mxu0
    %v1244 = vadd.f32 %v1231, %v1243
    %v1245 = vpop.f32.mrf.mxu0
    %1246 = vdwg.mxu0
    %1247 = vmatpush.bf16.msra.mxu0 %v970
    %1248 = vmatpush.bf16.msra.mxu0 %v963
    %1249 = vmatpush.bf16.msra.mxu0 %v956
    %1250 = vmatpush.bf16.msra.mxu0 %v949
    %1251 = vmatpush.bf16.msra.mxu0 %v942
    %1252 = vmatpush.bf16.msra.mxu0 %v935
    %1253 = vmatpush.bf16.msra.mxu0 %v928
    %1254 = vmatpush.bf16.msra.mxu0 %v921
    %1255 = vmatmul.bf16.gmra.mxu0 %v275
    %v1256 = vpop.f32.mrf.mxu0
    %v1257 = vadd.f32 %v1244, %v1256
    %v1258 = vpop.f32.mrf.mxu0
    %1259 = vdwg.mxu0
    %1260 = vmatpush.bf16.msra.mxu0 %v859
    %1261 = vmatpush.bf16.msra.mxu0 %v852
    %1262 = vmatpush.bf16.msra.mxu0 %v845
    %1263 = vmatpush.bf16.msra.mxu0 %v838
    %1264 = vmatpush.bf16.msra.mxu0 %v831
    %1265 = vmatpush.bf16.msra.mxu0 %v824
    %1266 = vmatpush.bf16.msra.mxu0 %v817
    %1267 = vmatpush.bf16.msra.mxu0 %v810
    %1268 = vmatmul.bf16.gmra.mxu0 %v273
    %v1269 = vpop.f32.mrf.mxu0
    %v1270 = vadd.f32 %v257, %v1269
    %v1271 = vpop.f32.mrf.mxu0
    %1272 = vdwg.mxu0
    %1273 = vmatpush.bf16.msra.mxu0 %v915
    %1274 = vmatpush.bf16.msra.mxu0 %v908
    %1275 = vmatpush.bf16.msra.mxu0 %v901
    %1276 = vmatpush.bf16.msra.mxu0 %v894
    %1277 = vmatpush.bf16.msra.mxu0 %v887
    %1278 = vmatpush.bf16.msra.mxu0 %v880
    %1279 = vmatpush.bf16.msra.mxu0 %v873
    %1280 = vmatpush.bf16.msra.mxu0 %v866
    %1281 = vmatmul.bf16.gmra.mxu0 %v274
    %v1282 = vpop.f32.mrf.mxu0
    %v1283 = vadd.f32 %v1270, %v1282
    %v1284 = vpop.f32.mrf.mxu0
    %1285 = vdwg.mxu0
    %1286 = vmatpush.bf16.msra.mxu0 %v971
    %1287 = vmatpush.bf16.msra.mxu0 %v964
    %1288 = vmatpush.bf16.msra.mxu0 %v957
    %1289 = vmatpush.bf16.msra.mxu0 %v950
    %1290 = vmatpush.bf16.msra.mxu0 %v943
    %1291 = vmatpush.bf16.msra.mxu0 %v936
    %1292 = vmatpush.bf16.msra.mxu0 %v929
    %1293 = vmatpush.bf16.msra.mxu0 %v922
    %1294 = vmatmul.bf16.gmra.mxu0 %v275
    %v1295 = vpop.f32.mrf.mxu0
    %v1296 = vadd.f32 %v1283, %v1295
    %v1297 = vpop.f32.mrf.mxu0
    %1298 = vdwg.mxu0
    %1299 = vmatpush.bf16.msra.mxu0 %v860
    %1300 = vmatpush.bf16.msra.mxu0 %v853
    %1301 = vmatpush.bf16.msra.mxu0 %v846
    %1302 = vmatpush.bf16.msra.mxu0 %v839
    %1303 = vmatpush.bf16.msra.mxu0 %v832
    %1304 = vmatpush.bf16.msra.mxu0 %v825
    %1305 = vmatpush.bf16.msra.mxu0 %v818
    %1306 = vmatpush.bf16.msra.mxu0 %v811
    %1307 = vmatmul.bf16.gmra.mxu0 %v273
    %v1308 = vpop.f32.mrf.mxu0
    %v1309 = vadd.f32 %v258, %v1308
    %v1310 = vpop.f32.mrf.mxu0
    %1311 = vdwg.mxu0
    %1312 = vmatpush.bf16.msra.mxu0 %v916
    %1313 = vmatpush.bf16.msra.mxu0 %v909
    %1314 = vmatpush.bf16.msra.mxu0 %v902
    %1315 = vmatpush.bf16.msra.mxu0 %v895
    %1316 = vmatpush.bf16.msra.mxu0 %v888
    %1317 = vmatpush.bf16.msra.mxu0 %v881
    %1318 = vmatpush.bf16.msra.mxu0 %v874
    %1319 = vmatpush.bf16.msra.mxu0 %v867
    %1320 = vmatmul.bf16.gmra.mxu0 %v274
    %v1321 = vpop.f32.mrf.mxu0
    %v1322 = vadd.f32 %v1309, %v1321
    %v1323 = vpop.f32.mrf.mxu0
    %1324 = vdwg.mxu0
    %1325 = vmatpush.bf16.msra.mxu0 %v972
    %1326 = vmatpush.bf16.msra.mxu0 %v965
    %1327 = vmatpush.bf16.msra.mxu0 %v958
    %1328 = vmatpush.bf16.msra.mxu0 %v951
    %1329 = vmatpush.bf16.msra.mxu0 %v944
    %1330 = vmatpush.bf16.msra.mxu0 %v937
    %1331 = vmatpush.bf16.msra.mxu0 %v930
    %1332 = vmatpush.bf16.msra.mxu0 %v923
    %1333 = vmatmul.bf16.gmra.mxu0 %v275
    %v1334 = vpop.f32.mrf.mxu0
    %v1335 = vadd.f32 %v1322, %v1334
    %v1336 = vpop.f32.mrf.mxu0
    %1337 = vdwg.mxu0
    %1338 = vmatpush.bf16.msra.mxu0 %v861
    %1339 = vmatpush.bf16.msra.mxu0 %v854
    %1340 = vmatpush.bf16.msra.mxu0 %v847
    %1341 = vmatpush.bf16.msra.mxu0 %v840
    %1342 = vmatpush.bf16.msra.mxu0 %v833
    %1343 = vmatpush.bf16.msra.mxu0 %v826
    %1344 = vmatpush.bf16.msra.mxu0 %v819
    %1345 = vmatpush.bf16.msra.mxu0 %v812
    %1346 = vmatmul.bf16.gmra.mxu0 %v273
    %v1347 = vpop.f32.mrf.mxu0
    %v1348 = vadd.f32 %v259, %v1347
    %v1349 = vpop.f32.mrf.mxu0
    %1350 = vdwg.mxu0
    %1351 = vmatpush.bf16.msra.mxu0 %v917
    %1352 = vmatpush.bf16.msra.mxu0 %v910
    %1353 = vmatpush.bf16.msra.mxu0 %v903
    %1354 = vmatpush.bf16.msra.mxu0 %v896
    %1355 = vmatpush.bf16.msra.mxu0 %v889
    %1356 = vmatpush.bf16.msra.mxu0 %v882
    %1357 = vmatpush.bf16.msra.mxu0 %v875
    %1358 = vmatpush.bf16.msra.mxu0 %v868
    %1359 = vmatmul.bf16.gmra.mxu0 %v274
    %v1360 = vpop.f32.mrf.mxu0
    %v1361 = vadd.f32 %v1348, %v1360
    %v1362 = vpop.f32.mrf.mxu0
    %1363 = vdwg.mxu0
    %1364 = vmatpush.bf16.msra.mxu0 %v973
    %1365 = vmatpush.bf16.msra.mxu0 %v966
    %1366 = vmatpush.bf16.msra.mxu0 %v959
    %1367 = vmatpush.bf16.msra.mxu0 %v952
    %1368 = vmatpush.bf16.msra.mxu0 %v945
    %1369 = vmatpush.bf16.msra.mxu0 %v938
    %1370 = vmatpush.bf16.msra.mxu0 %v931
    %1371 = vmatpush.bf16.msra.mxu0 %v924
    %1372 = vmatmul.bf16.gmra.mxu0 %v275
    %v1373 = vpop.f32.mrf.mxu0
    %v1374 = vadd.f32 %v1361, %v1373
    %v1375 = vpop.f32.mrf.mxu0
    %1376 = vdwg.mxu0
    %1377 = vmatpush.bf16.msra.mxu0 %v862
    %1378 = vmatpush.bf16.msra.mxu0 %v855
    %1379 = vmatpush.bf16.msra.mxu0 %v848
    %1380 = vmatpush.bf16.msra.mxu0 %v841
    %1381 = vmatpush.bf16.msra.mxu0 %v834
    %1382 = vmatpush.bf16.msra.mxu0 %v827
    %1383 = vmatpush.bf16.msra.mxu0 %v820
    %1384 = vmatpush.bf16.msra.mxu0 %v813
    %1385 = vmatmul.bf16.gmra.mxu0 %v273
    %v1386 = vpop.f32.mrf.mxu0
    %v1387 = vadd.f32 %v260, %v1386
    %v1388 = vpop.f32.mrf.mxu0
    %1389 = vdwg.mxu0
    %1390 = vmatpush.bf16.msra.mxu0 %v918
    %1391 = vmatpush.bf16.msra.mxu0 %v911
    %1392 = vmatpush.bf16.msra.mxu0 %v904
    %1393 = vmatpush.bf16.msra.mxu0 %v897
    %1394 = vmatpush.bf16.msra.mxu0 %v890
    %1395 = vmatpush.bf16.msra.mxu0 %v883
    %1396 = vmatpush.bf16.msra.mxu0 %v876
    %1397 = vmatpush.bf16.msra.mxu0 %v869
    %1398 = vmatmul.bf16.gmra.mxu0 %v274
    %v1399 = vpop.f32.mrf.mxu0
    %v1400 = vadd.f32 %v1387, %v1399
    %v1401 = vpop.f32.mrf.mxu0
    %1402 = vdwg.mxu0
    %1403 = vmatpush.bf16.msra.mxu0 %v974
    %1404 = vmatpush.bf16.msra.mxu0 %v967
    %1405 = vmatpush.bf16.msra.mxu0 %v960
    %1406 = vmatpush.bf16.msra.mxu0 %v953
    %1407 = vmatpush.bf16.msra.mxu0 %v946
    %1408 = vmatpush.bf16.msra.mxu0 %v939
    %1409 = vmatpush.bf16.msra.mxu0 %v932
    %1410 = vmatpush.bf16.msra.mxu0 %v925
    %1411 = vmatmul.bf16.gmra.mxu0 %v275
    %v1412 = vpop.f32.mrf.mxu0
    %v1413 = vadd.f32 %v1400, %v1412
    %v1414 = vpop.f32.mrf.mxu0
    %1415 = vdwg.mxu0
    %v1416 = vsub.f32 0.0, %v1179
    %v1417 = vsub.f32 0.0, %v1218
    %v1418 = vsub.f32 0.0, %v1257
    %v1419 = vsub.f32 0.0, %v1296
    %v1420 = vsub.f32 0.0, %v1335
    %v1421 = vsub.f32 0.0, %v1374
    %v1422 = vsub.f32 0.0, %v1413
    %v1423 = vmul.f32 %v1416, 1.442695
    %v1424 = vpow.pop %v1423
    %v1425 = vmul.f32 %v1417, 1.442695
    %v1426 = vpow.pop %v1425
    %v1427 = vmul.f32 %v1418, 1.442695
    %v1428 = vpow.pop %v1427
    %v1429 = vmul.f32 %v1419, 1.442695
    %v1430 = vpow.pop %v1429
    %v1431 = vmul.f32 %v1420, 1.442695
    %v1432 = vpow.pop %v1431
    %v1433 = vmul.f32 %v1421, 1.442695
    %v1434 = vpow.pop %v1433
    %v1435 = vmul.f32 %v1422, 1.442695
    %v1436 = vpow.pop %v1435
    %v1437 = vadd.f32 %v1424, 1.0
    %v1438 = vadd.f32 %v1426, 1.0
    %v1439 = vadd.f32 %v1428, 1.0
    %v1440 = vadd.f32 %v1430, 1.0
    %v1441 = vadd.f32 %v1432, 1.0
    %v1442 = vadd.f32 %v1434, 1.0
    %v1443 = vadd.f32 %v1436, 1.0
    %v1444 = vrcp.pop %v1437
    %v1445 = vrcp.pop %v1438
    %v1446 = vrcp.pop %v1439
    %v1447 = vrcp.pop %v1440
    %v1448 = vrcp.pop %v1441
    %v1449 = vrcp.pop %v1442
    %v1450 = vrcp.pop %v1443
    %1451 = vst [vmem:[#allocation8] sm:$0xff] %v1444
    %1452 = vst [vmem:[#allocation8 + $0x8] sm:$0xff] %v1445
    %1453 = vst [vmem:[#allocation8 + $0x10] sm:$0xff] %v1446
    %1454 = vst [vmem:[#allocation8 + $0x18] sm:$0xff] %v1447
    %1455 = vst [vmem:[#allocation8 + $0x20] sm:$0xff] %v1448
    %1456 = vst [vmem:[#allocation8 + $0x28] sm:$0xff] %v1449
    %1457 = vst [vmem:[#allocation8 + $0x30] sm:$0xff] %v1450
    // Predicated region
    $region26: #{tpu_custom_call.1} parent=1 // pred_check
      _
    $region27: #{tpu_custom_call.1} parent=1 // pred_check_branch
      %1459 = sbr.rel (0) target = $region29
    $region28: #{tpu_custom_call.1} parent=1 // pred_region
      %1461 = vsyncadd [#allocation4], 0
      %s1463 = sshll.u32 [#allocation8], 4
      %s1464 = int_to_ptr.vmem [resolvable:$true] %s1463
      %s1465 = sshll.u32 %s3, 4
      %s1466 = int_to_ptr.hbm [resolvable:$true] %s1465
      %1468 = dma.vmem_to_hbm [thread:$0]  %s1464, 896, %s1466, [#allocation4]
    $region29: #{tpu_custom_call.1} parent=1 // pred_fallthru
      _
    // Predicated region
    $region30: #{tpu_custom_call.1} parent=1 // pred_check
      _
    $region31: #{tpu_custom_call.1} parent=1 // pred_check_branch
      %1470 = sbr.rel (0) target = $region33
    $region32: #{tpu_custom_call.1} parent=1 // pred_region
      %1472 = dma.done [#allocation4], 896
    $region33: #{tpu_custom_call.1} parent=1 // pred_fallthru
      _
    %1473 = vsyncpa [#allocation3], 1
    %1474 = vsyncpa [#allocation6], 1
    %1475 = vsyncpa [#allocation4], 1

</llo_original>
